<compile_context>
chip_gen: v7x
topology: tpu7x:2x2x1
jax: 0.10.0
libtpu: 0.0.40
codegen_flags: <defaults>
</compile_context>

<pallas_src>
import math
import functools

import jax
import jax.numpy as jnp
from jax.experimental import pallas as pl
from jax.experimental.pallas import tpu as pltpu

BBOX_XFORM_CLIP = math.log(1000.0 / 16)
ANCHOR_SIZES_PER_LEVEL = ((8.0, 16.0, 32.0), (16.0, 32.0, 64.0))
ASPECT_RATIOS = (1.0,)
NUM_ANCHORS = len(ANCHOR_SIZES_PER_LEVEL[0]) * len(ASPECT_RATIOS)  # A = 3


def _round_up(x, m):
    return ((x + m - 1) // m) * m


HEAD_ROWS = 5 * NUM_ANCHORS                            # obj (A) + deltas (4A) = 15
HEAD_PAD = _round_up(HEAD_ROWS, 8)                     # 16 (full-sublane matmul out)
OUT_ROWS = _round_up(HEAD_PAD + 4 * NUM_ANCHORS, 8)    # 32: [head | proposals | pad]


# ---------------------------------------------------------------------------
# Pallas kernel: fused RPN head (3x3 conv + ReLU + fused 1x1 heads) + box
# decode, coord-major.  One grid step = one image of one pyramid level.
#   slab : (C, P_slab)  bf16   zero-padded feature map, flattened with padded
#                              width stride Wp = W + 2 (single HBM copy).
#   out  : (OUT_ROWS, P) f32   rows 0..A-1 obj, A..5A-1 deltas (c*A + a),
#                              HEAD_PAD..HEAD_PAD+4A-1 proposals (c*A + a).
# ---------------------------------------------------------------------------
def rpn_fused_kernel(slab_ref, w3_ref, b3_ref, wc_ref, bc_ref, anc_ref, o_ref,
                     *, wp, n_out, num_anchors, clip):
    A = num_anchors
    s = slab_ref[...]                                   # (C, P_slab) bf16
    # In-VMEM im2col: 9 statically shifted views of the padded slab.  Output
    # position q = y*Wp + x  ->  tap (ky, kx) lives at q + ky*Wp + kx.
    taps = [s[:, ky * wp + kx: ky * wp + kx + n_out]
            for ky in range(3) for kx in range(3)]
    x_col = jnp.concatenate(taps, axis=0)               # (9C, P) bf16

    # Single K=9C matmul for the 3x3 conv, f32 accumulation.
    hidden = jnp.dot(w3_ref[...], x_col, preferred_element_type=jnp.float32)
    hidden = jnp.maximum(hidden + b3_ref[...], 0.0)     # (C, P) f32

    # Fused objectness + delta 1x1 heads (bf16 operands, f32 accumulation).
    head = jnp.dot(wc_ref[...], hidden.astype(wc_ref.dtype),
                   preferred_element_type=jnp.float32) + bc_ref[...]  # (16, P)

    # Fused torchvision-style box decode (coord-major, vectorized over A x P).
    anc = anc_ref[...]                                   # (4A, P) f32
    d = head[A:5 * A]                                    # (4A, P) deltas
    x1, y1 = anc[0:A], anc[A:2 * A]
    x2, y2 = anc[2 * A:3 * A], anc[3 * A:]
    w = x2 - x1
    h = y2 - y1
    cx = x1 + 0.5 * w
    cy = y1 + 0.5 * h
    dx, dy = d[0:A], d[A:2 * A]
    dw = jnp.minimum(d[2 * A:3 * A], clip)
    dh = jnp.minimum(d[3 * A:], clip)
    pcx = dx * w + cx
    pcy = dy * h + cy
    pw = jnp.exp(dw) * w
    ph = jnp.exp(dh) * h
    props = jnp.concatenate([pcx - 0.5 * pw, pcy - 0.5 * ph,
                             pcx + 0.5 * pw, pcy + 0.5 * ph], axis=0)  # (4A, P)

    pad_rows = o_ref.shape[0] - head.shape[0] - props.shape[0]
    o_ref[...] = jnp.concatenate(
        [head, props, jnp.zeros((pad_rows, n_out), jnp.float32)], axis=0)


def rpn_head_level(slab, anc_cm, kp, *, wp, n_out, clip):
    """slab: (B, C, P_slab) bf16, anc_cm: (4A, n_out) f32 -> (B, OUT_ROWS, n_out)."""
    B, C, p_slab = slab.shape
    kernel = functools.partial(rpn_fused_kernel, wp=wp, n_out=n_out,
                               num_anchors=NUM_ANCHORS, clip=clip)
    return pl.pallas_call(
        kernel,
        out_shape=jax.ShapeDtypeStruct((B, OUT_ROWS, n_out), jnp.float32),
        grid=(B,),
        in_specs=[
            pl.BlockSpec((None, C, p_slab), lambda b: (b, 0, 0)),      # slab (squeezed batch)
            pl.BlockSpec((C, 9 * C), lambda b: (0, 0)),                # w3t bf16
            pl.BlockSpec((C, 1), lambda b: (0, 0)),                    # b3  f32
            pl.BlockSpec((HEAD_PAD, C), lambda b: (0, 0)),             # wcomb bf16
            pl.BlockSpec((HEAD_PAD, 1), lambda b: (0, 0)),             # bcomb f32
            pl.BlockSpec((4 * NUM_ANCHORS, n_out), lambda b: (0, 0)),  # anchors f32
        ],
        out_specs=pl.BlockSpec((None, OUT_ROWS, n_out), lambda b: (b, 0, 0)),
        compiler_params=pltpu.CompilerParams(
            dimension_semantics=("parallel",),
            vmem_limit_bytes=32 * 1024 * 1024),
    )(slab, kp["w3t"], kp["b3"], kp["wcomb"], kp["bcomb"], anc_cm)


# ---------------------------------------------------------------------------
# Plain-JAX glue: anchors, parameter prep, full forward.
# ---------------------------------------------------------------------------
def generate_anchors(feat_hw, img_hw, sizes, aspect_ratios):
    """torchvision-style grid anchors, row order = (h, w, anchor)."""
    H, W = feat_hw
    stride_y = img_hw[0] / H
    stride_x = img_hw[1] / W
    scales = jnp.asarray(sizes, jnp.float32)
    ratios = jnp.asarray(aspect_ratios, jnp.float32)
    h_ratios = jnp.sqrt(ratios)
    w_ratios = 1.0 / h_ratios
    ws = (w_ratios[:, None] * scales[None, :]).reshape(-1)
    hs = (h_ratios[:, None] * scales[None, :]).reshape(-1)
    base = jnp.stack([-ws, -hs, ws, hs], axis=1) / 2.0                 # (A, 4)
    shifts_x = jnp.arange(W, dtype=jnp.float32) * stride_x
    shifts_y = jnp.arange(H, dtype=jnp.float32) * stride_y
    sy, sx = jnp.meshgrid(shifts_y, shifts_x, indexing="ij")
    shifts = jnp.stack([sx.reshape(-1), sy.reshape(-1),
                        sx.reshape(-1), sy.reshape(-1)], axis=1)       # (H*W, 4)
    return (shifts[:, None, :] + base[None, :, :]).reshape(-1, 4)


def init_rpn_head_params(key, channels, num_anchors):
    """Canonical (PyTorch-convention) parameters, all f32."""
    k1, k2, k3, k4, k5, k6 = jax.random.split(key, 6)
    return {
        "w3": 0.05 * jax.random.normal(k1, (channels, channels, 3, 3), jnp.float32),  # OIHW
        "b3": 0.01 * jax.random.normal(k2, (channels,), jnp.float32),
        "wobj": 0.05 * jax.random.normal(k3, (num_anchors, channels), jnp.float32),
        # delta out-channel convention = a*4 + c (PyTorch RPNHead view).
        "bobj": 0.01 * jax.random.normal(k4, (num_anchors,), jnp.float32),
        "wdel": 0.05 * jax.random.normal(k5, (4 * num_anchors, channels), jnp.float32),
        "bdel": 0.01 * jax.random.normal(k6, (4 * num_anchors,), jnp.float32),
    }


def prepare_head_params(p):
    """Canonical params -> fused, coord-major, padded kernel layout."""
    C = p["w3"].shape[0]
    A = p["wobj"].shape[0]
    # (Cout, Cin, ky, kx) -> (Cout, (ky*3+kx)*C + Cin), bf16 for the big matmul.
    w3t = p["w3"].transpose(0, 2, 3, 1).reshape(C, 9 * C).astype(jnp.bfloat16)
    # Delta rows reordered a*4+c -> c*A+a, fused with objectness, padded to 16.
    wdel_cm = p["wdel"].reshape(A, 4, C).transpose(1, 0, 2).reshape(4 * A, C)
    wcomb = jnp.concatenate(
        [p["wobj"], wdel_cm, jnp.zeros((HEAD_PAD - 5 * A, C), jnp.float32)],
        axis=0).astype(jnp.bfloat16)                                   # (16, C)
    bdel_cm = p["bdel"].reshape(A, 4).T.reshape(4 * A)
    bcomb = jnp.concatenate(
        [p["bobj"], bdel_cm, jnp.zeros((HEAD_PAD - 5 * A,), jnp.float32)]
    ).reshape(HEAD_PAD, 1).astype(jnp.float32)
    return {"w3t": w3t,
            "b3": p["b3"].reshape(C, 1).astype(jnp.float32),
            "wcomb": wcomb,
            "bcomb": bcomb}


def batches_rpn_forward(image_list, features, params,
                        bbox_xform_clip=BBOX_XFORM_CLIP):
    """Mirrors Batches_RPN.forward with proposals_filter=None, backbone=None."""
    B = len(image_list)
    img_h, img_w = image_list[0].shape[-2], image_list[0].shape[-1]
    A = NUM_ANCHORS
    kp = prepare_head_params(params)

    # TODO(synk): merge all pyramid levels (shared weights) into a single
    # pallas_call via scalar-prefetched per-level tap offsets; kept per-level
    # here because the tap offsets must stay static for robust lowering.
    level_obj, level_del, level_prop, level_anchors = [], [], [], []
    for f, sizes in zip(features, ANCHOR_SIZES_PER_LEVEL):
        _, C, H, W = f.shape
        Wp = W + 2
        HW = H * W
        Pout = H * Wp                                   # padded-width positions
        n_out = _round_up(max(Pout, 128), 128)          # lane-dense output width
        p_slab = _round_up(n_out + 2 * Wp + 2, 128)     # slab length incl. halo

        # Single zero-padded bf16 slab per level (no 9x im2col replication).
        xp = jnp.pad(f.astype(jnp.bfloat16), ((0, 0), (0, 0), (1, 1), (1, 1)))
        slab = xp.reshape(B, C, (H + 2) * Wp)
        slab = jnp.pad(slab, ((0, 0), (0, 0), (0, p_slab - (H + 2) * Wp)))

        # Anchors: canonical (HW*A, 4) and padded coord-major (4A, n_out).
        anc = generate_anchors((H, W), (img_h, img_w), sizes, ASPECT_RATIOS)
        level_anchors.append(anc)
        anc_cm = anc.reshape(H, W, A, 4).transpose(3, 2, 0, 1)          # (4, A, H, W)
        anc_cm = jnp.pad(anc_cm, ((0, 0), (0, 0), (0, 0), (0, Wp - W)))
        anc_cm = anc_cm.reshape(4 * A, Pout)
        anc_cm = jnp.pad(anc_cm, ((0, 0), (0, n_out - Pout)))

        # TODO(synk): for very large levels, switch to a position-tiled manual
        # DMA (halo) pipeline to bound the per-step VMEM block.
        out = rpn_head_level(slab, anc_cm, kp, wp=Wp, n_out=n_out,
                             clip=bbox_xform_clip)                      # (B, 32, n_out)

        # Drop the width-pad columns and tile-pad tail -> true HW positions.
        out = out[:, :, :Pout].reshape(B, OUT_ROWS, H, Wp)[:, :, :, :W]
        out = out.reshape(B, OUT_ROWS, HW)
        obj_cm = out[:, :A]                                             # (B, A, HW)
        del_cm = out[:, A:5 * A].reshape(B, 4, A, HW)
        prop_cm = out[:, HEAD_PAD:HEAD_PAD + 4 * A].reshape(B, 4, A, HW)
        # Single layout hop to the PyTorch (h, w, a)-major convention.
        level_obj.append(obj_cm.transpose(0, 2, 1).reshape(B, HW * A))
        level_del.append(del_cm.transpose(0, 3, 2, 1).reshape(B, HW * A, 4))
        level_prop.append(prop_cm.transpose(0, 3, 2, 1).reshape(B, HW * A, 4))

    bbox_objectness = jnp.concatenate(level_obj, axis=1)                # (B, Npi)
    bbox_deltas = jnp.concatenate(level_del, axis=1).reshape(-1, 4)     # (N, 4)
    proposals = jnp.concatenate(level_prop, axis=1)                     # (B, Npi, 4)

    anchors_per_image = jnp.concatenate(level_anchors, axis=0)          # (Npi, 4)
    anchors = jnp.tile(anchors_per_image, (B, 1))                       # (N, 4)

    # TODO(synk): proposals_filter (NMS / top-k) is None in this configuration.
    proposal_list = [p for p in proposals]
    return proposal_list, anchors, bbox_objectness, bbox_deltas


# ---------------------------------------------------------------------------
# Pure-JAX reference (correctness check only): same bf16 quantization of the
# conv / 1x1 heads as the kernel, torch-convention layout handling.
# ---------------------------------------------------------------------------
def _ref_head(x_nchw, p):
    xb = x_nchw.astype(jnp.bfloat16)
    wb = p["w3"].astype(jnp.bfloat16)
    h = jax.lax.conv_general_dilated(
        xb, wb, (1, 1), "SAME",
        dimension_numbers=("NCHW", "OIHW", "NCHW"),
        preferred_element_type=jnp.float32)
    h = jnp.maximum(h + p["b3"][None, :, None, None], 0.0)
    hb = h.astype(jnp.bfloat16)
    obj = jnp.einsum("bchw,ac->bahw", hb, p["wobj"].astype(jnp.bfloat16),
                     preferred_element_type=jnp.float32) + p["bobj"][None, :, None, None]
    dl = jnp.einsum("bchw,dc->bdhw", hb, p["wdel"].astype(jnp.bfloat16),
                    preferred_element_type=jnp.float32) + p["bdel"][None, :, None, None]
    return obj, dl


def _channels_to_preds(x, channels):
    B, _, H, W = x.shape
    return x.reshape(B, -1, channels, H, W).transpose(0, 3, 4, 1, 2).reshape(B, -1, channels)


def reference_forward(image_list, features, params, clip=BBOX_XFORM_CLIP):
    B = len(image_list)
    img_h, img_w = image_list[0].shape[-2], image_list[0].shape[-1]
    objs, dels = [], []
    for f in features:
        o, d = _ref_head(f, params)
        objs.append(_channels_to_preds(o, 1))
        dels.append(_channels_to_preds(d, 4))
    bbox_obj = jnp.concatenate(objs, axis=1).reshape(B, -1)
    bbox_del = jnp.concatenate(dels, axis=1).reshape(-1, 4)
    anchors_one = jnp.concatenate(
        [generate_anchors((f.shape[2], f.shape[3]), (img_h, img_w),
                          sizes, ASPECT_RATIOS)
         for f, sizes in zip(features, ANCHOR_SIZES_PER_LEVEL)], axis=0)
    anchors = jnp.tile(anchors_one, (B, 1))
    w = anchors[:, 2] - anchors[:, 0]
    h = anchors[:, 3] - anchors[:, 1]
    cx = anchors[:, 0] + 0.5 * w
    cy = anchors[:, 1] + 0.5 * h
    dx, dy = bbox_del[:, 0], bbox_del[:, 1]
    dw = jnp.minimum(bbox_del[:, 2], clip)
    dh = jnp.minimum(bbox_del[:, 3], clip)
    pcx, pcy = dx * w + cx, dy * h + cy
    pw, ph = jnp.exp(dw) * w, jnp.exp(dh) * h
    props = jnp.stack([pcx - 0.5 * pw, pcy - 0.5 * ph,
                       pcx + 0.5 * pw, pcy + 0.5 * ph], axis=1)
    return bbox_obj, bbox_del, props


if __name__ == "__main__":
    key = jax.random.PRNGKey(0)
    k_img, k_f0, k_f1, k_param = jax.random.split(key, 4)

    B, C = 2, 32
    # image_list: 2 images of shape (3, 64, 64) (NCHW per image, like PyTorch).
    img_keys = jax.random.split(k_img, B)
    image_list = [jax.random.normal(img_keys[i], (3, 64, 64), jnp.float32)
                  for i in range(B)]
    # Two feature-pyramid levels (NCHW).
    features = [jax.random.normal(k_f0, (B, C, 16, 16), jnp.float32),
                jax.random.normal(k_f1, (B, C, 8, 8), jnp.float32)]

    params = init_rpn_head_params(k_param, C, NUM_ANCHORS)

    proposals, anchors, bbox_objectness, bbox_deltas = batches_rpn_forward(
        image_list, features, params)

    # Block on all kernel outputs.
    jax.block_until_ready((proposals, anchors, bbox_objectness, bbox_deltas))

    # Correctness check against the pure-JAX reference.
    ref_obj, ref_del, ref_props = reference_forward(image_list, features, params)
    props_stacked = jnp.stack(proposals, axis=0).reshape(-1, 4)
    assert bbox_objectness.shape == ref_obj.shape
    assert bbox_deltas.shape == ref_del.shape
    assert props_stacked.shape == ref_props.shape
    assert jnp.allclose(bbox_objectness, ref_obj, atol=2e-3, rtol=2e-3)
    assert jnp.allclose(bbox_deltas, ref_del, atol=2e-3, rtol=2e-3)
    assert jnp.allclose(props_stacked, ref_props, atol=2e-2, rtol=5e-3)

    print("KERNEL_OK")
</pallas_src>

<mosaic_0001>
module attributes {stable_mosaic.version = 11 : i64} {
  func.func @rpn_fused_kernel(%arg0: i32, %arg1: memref<1x32x512xbf16, #tpu.memory_space<vmem>>, %arg2: memref<32x288xbf16, #tpu.memory_space<vmem>>, %arg3: memref<32x1xf32, #tpu.memory_space<vmem>>, %arg4: memref<16x32xbf16, #tpu.memory_space<vmem>>, %arg5: memref<16x1xf32, #tpu.memory_space<vmem>>, %arg6: memref<12x384xf32, #tpu.memory_space<vmem>>, %arg7: memref<1x32x384xf32, #tpu.memory_space<vmem>>) attributes {dimension_semantics = [#tpu.dimension_semantics<parallel>], iteration_bounds = array<i64: 2>, scalar_prefetch = 0 : i64, scratch_operands = 0 : i64, tpu.core_type = #tpu.core_type<tc>, window_params = [{transform_indices = @transform_0, window_bounds = array<i64: 1, 32, 512>}, {pipeline_mode = #tpu.pipeline_mode<synchronous>, transform_indices = @transform_1, window_bounds = array<i64: 32, 288>}, {pipeline_mode = #tpu.pipeline_mode<synchronous>, transform_indices = @transform_2, window_bounds = array<i64: 32, 1>}, {pipeline_mode = #tpu.pipeline_mode<synchronous>, transform_indices = @transform_3, window_bounds = array<i64: 16, 32>}, {pipeline_mode = #tpu.pipeline_mode<synchronous>, transform_indices = @transform_4, window_bounds = array<i64: 16, 1>}, {pipeline_mode = #tpu.pipeline_mode<synchronous>, transform_indices = @transform_5, window_bounds = array<i64: 12, 384>}, {transform_indices = @transform_6, window_bounds = array<i64: 1, 32, 384>}]} {
    %c0 = arith.constant 0 : index
    %c0_0 = arith.constant 0 : index
    %c0_1 = arith.constant 0 : index
    %0 = vector.load %arg1[%c0, %c0_0, %c0_1] : memref<1x32x512xbf16, #tpu.memory_space<vmem>>, vector<1x32x512xbf16>
    %1 = vector.shape_cast %0 : vector<1x32x512xbf16> to vector<32x512xbf16>
    %2 = vector.extract_strided_slice %1 {offsets = [0, 0], sizes = [32, 384], strides = [1, 1]} : vector<32x512xbf16> to vector<32x384xbf16>
    %3 = vector.extract_strided_slice %1 {offsets = [0, 1], sizes = [32, 384], strides = [1, 1]} : vector<32x512xbf16> to vector<32x384xbf16>
    %4 = vector.extract_strided_slice %1 {offsets = [0, 2], sizes = [32, 384], strides = [1, 1]} : vector<32x512xbf16> to vector<32x384xbf16>
    %5 = vector.extract_strided_slice %1 {offsets = [0, 18], sizes = [32, 384], strides = [1, 1]} : vector<32x512xbf16> to vector<32x384xbf16>
    %6 = vector.extract_strided_slice %1 {offsets = [0, 19], sizes = [32, 384], strides = [1, 1]} : vector<32x512xbf16> to vector<32x384xbf16>
    %7 = vector.extract_strided_slice %1 {offsets = [0, 20], sizes = [32, 384], strides = [1, 1]} : vector<32x512xbf16> to vector<32x384xbf16>
    %8 = vector.extract_strided_slice %1 {offsets = [0, 36], sizes = [32, 384], strides = [1, 1]} : vector<32x512xbf16> to vector<32x384xbf16>
    %9 = vector.extract_strided_slice %1 {offsets = [0, 37], sizes = [32, 384], strides = [1, 1]} : vector<32x512xbf16> to vector<32x384xbf16>
    %10 = vector.extract_strided_slice %1 {offsets = [0, 38], sizes = [32, 384], strides = [1, 1]} : vector<32x512xbf16> to vector<32x384xbf16>
    %11 = tpu.concatenate %2, %3, %4, %5, %6, %7, %8, %9, %10 in 0 : vector<32x384xbf16>, vector<32x384xbf16>, vector<32x384xbf16>, vector<32x384xbf16>, vector<32x384xbf16>, vector<32x384xbf16>, vector<32x384xbf16>, vector<32x384xbf16>, vector<32x384xbf16> -> vector<288x384xbf16>
    %c0_2 = arith.constant 0 : index
    %c0_3 = arith.constant 0 : index
    %12 = vector.load %arg2[%c0_2, %c0_3] : memref<32x288xbf16, #tpu.memory_space<vmem>>, vector<32x288xbf16>
    %cst = arith.constant dense<0.000000e+00> : vector<32x384xf32>
    %13 = tpu.matmul %12, %11, %cst {dimension_numbers = #tpu.dot_dimension_numbers<[1], [0], [0], [1], [0, 0, 1, 1], [], []>} : vector<32x288xbf16>, vector<288x384xbf16>, vector<32x384xf32> -> vector<32x384xf32>
    %c0_4 = arith.constant 0 : index
    %c0_5 = arith.constant 0 : index
    %14 = vector.load %arg3[%c0_4, %c0_5] : memref<32x1xf32, #tpu.memory_space<vmem>>, vector<32x1xf32>
    %15 = vector.broadcast %14 : vector<32x1xf32> to vector<32x384xf32>
    %16 = arith.addf %13, %15 : vector<32x384xf32>
    %cst_6 = arith.constant 0.000000e+00 : f32
    %17 = vector.broadcast %cst_6 : f32 to vector<32x384xf32>
    %18 = arith.maximumf %16, %17 : vector<32x384xf32>
    %c0_7 = arith.constant 0 : index
    %c0_8 = arith.constant 0 : index
    %19 = vector.load %arg4[%c0_7, %c0_8] : memref<16x32xbf16, #tpu.memory_space<vmem>>, vector<16x32xbf16>
    %20 = arith.truncf %18 : vector<32x384xf32> to vector<32x384xbf16>
    %cst_9 = arith.constant dense<0.000000e+00> : vector<16x384xf32>
    %21 = tpu.matmul %19, %20, %cst_9 {dimension_numbers = #tpu.dot_dimension_numbers<[1], [0], [0], [1], [0, 0, 1, 1], [], []>} : vector<16x32xbf16>, vector<32x384xbf16>, vector<16x384xf32> -> vector<16x384xf32>
    %c0_10 = arith.constant 0 : index
    %c0_11 = arith.constant 0 : index
    %22 = vector.load %arg5[%c0_10, %c0_11] : memref<16x1xf32, #tpu.memory_space<vmem>>, vector<16x1xf32>
    %23 = vector.broadcast %22 : vector<16x1xf32> to vector<16x384xf32>
    %24 = arith.addf %21, %23 : vector<16x384xf32>
    %c0_12 = arith.constant 0 : index
    %c0_13 = arith.constant 0 : index
    %25 = vector.load %arg6[%c0_12, %c0_13] : memref<12x384xf32, #tpu.memory_space<vmem>>, vector<12x384xf32>
    %26 = vector.extract_strided_slice %24 {offsets = [3, 0], sizes = [12, 384], strides = [1, 1]} : vector<16x384xf32> to vector<12x384xf32>
    %27 = vector.extract_strided_slice %25 {offsets = [0, 0], sizes = [3, 384], strides = [1, 1]} : vector<12x384xf32> to vector<3x384xf32>
    %28 = vector.extract_strided_slice %25 {offsets = [3, 0], sizes = [3, 384], strides = [1, 1]} : vector<12x384xf32> to vector<3x384xf32>
    %29 = vector.extract_strided_slice %25 {offsets = [6, 0], sizes = [3, 384], strides = [1, 1]} : vector<12x384xf32> to vector<3x384xf32>
    %30 = vector.extract_strided_slice %25 {offsets = [9, 0], sizes = [3, 384], strides = [1, 1]} : vector<12x384xf32> to vector<3x384xf32>
    %31 = arith.subf %29, %27 : vector<3x384xf32>
    %32 = arith.subf %30, %28 : vector<3x384xf32>
    %cst_14 = arith.constant 5.000000e-01 : f32
    %33 = vector.broadcast %cst_14 : f32 to vector<3x384xf32>
    %34 = arith.mulf %33, %31 : vector<3x384xf32>
    %35 = arith.addf %27, %34 : vector<3x384xf32>
    %cst_15 = arith.constant 5.000000e-01 : f32
    %36 = vector.broadcast %cst_15 : f32 to vector<3x384xf32>
    %37 = arith.mulf %36, %32 : vector<3x384xf32>
    %38 = arith.addf %28, %37 : vector<3x384xf32>
    %39 = vector.extract_strided_slice %26 {offsets = [0, 0], sizes = [3, 384], strides = [1, 1]} : vector<12x384xf32> to vector<3x384xf32>
    %40 = vector.extract_strided_slice %26 {offsets = [3, 0], sizes = [3, 384], strides = [1, 1]} : vector<12x384xf32> to vector<3x384xf32>
    %41 = vector.extract_strided_slice %26 {offsets = [6, 0], sizes = [3, 384], strides = [1, 1]} : vector<12x384xf32> to vector<3x384xf32>
    %cst_16 = arith.constant 4.13516665 : f32
    %42 = vector.broadcast %cst_16 : f32 to vector<3x384xf32>
    %43 = arith.minimumf %41, %42 : vector<3x384xf32>
    %44 = vector.extract_strided_slice %26 {offsets = [9, 0], sizes = [3, 384], strides = [1, 1]} : vector<12x384xf32> to vector<3x384xf32>
    %cst_17 = arith.constant 4.13516665 : f32
    %45 = vector.broadcast %cst_17 : f32 to vector<3x384xf32>
    %46 = arith.minimumf %44, %45 : vector<3x384xf32>
    %47 = arith.mulf %39, %31 : vector<3x384xf32>
    %48 = arith.addf %47, %35 : vector<3x384xf32>
    %49 = arith.mulf %40, %32 : vector<3x384xf32>
    %50 = arith.addf %49, %38 : vector<3x384xf32>
    %51 = math.exp %43 : vector<3x384xf32>
    %52 = arith.mulf %51, %31 : vector<3x384xf32>
    %53 = math.exp %46 : vector<3x384xf32>
    %54 = arith.mulf %53, %32 : vector<3x384xf32>
    %cst_18 = arith.constant 5.000000e-01 : f32
    %55 = vector.broadcast %cst_18 : f32 to vector<3x384xf32>
    %56 = arith.mulf %55, %52 : vector<3x384xf32>
    %57 = arith.subf %48, %56 : vector<3x384xf32>
    %cst_19 = arith.constant 5.000000e-01 : f32
    %58 = vector.broadcast %cst_19 : f32 to vector<3x384xf32>
    %59 = arith.mulf %58, %54 : vector<3x384xf32>
    %60 = arith.subf %50, %59 : vector<3x384xf32>
    %cst_20 = arith.constant 5.000000e-01 : f32
    %61 = vector.broadcast %cst_20 : f32 to vector<3x384xf32>
    %62 = arith.mulf %61, %52 : vector<3x384xf32>
    %63 = arith.addf %48, %62 : vector<3x384xf32>
    %cst_21 = arith.constant 5.000000e-01 : f32
    %64 = vector.broadcast %cst_21 : f32 to vector<3x384xf32>
    %65 = arith.mulf %64, %54 : vector<3x384xf32>
    %66 = arith.addf %50, %65 : vector<3x384xf32>
    %67 = tpu.concatenate %57, %60, %63, %66 in 0 : vector<3x384xf32>, vector<3x384xf32>, vector<3x384xf32>, vector<3x384xf32> -> vector<12x384xf32>
    %cst_22 = arith.constant 0.000000e+00 : f32
    %68 = vector.broadcast %cst_22 : f32 to vector<4x384xf32>
    %69 = tpu.concatenate %24, %67, %68 in 0 : vector<16x384xf32>, vector<12x384xf32>, vector<4x384xf32> -> vector<32x384xf32>
    %c0_23 = arith.constant 0 : index
    %c0_24 = arith.constant 0 : index
    %c0_25 = arith.constant 0 : index
    %70 = vector.load %arg7[%c0_23, %c0_24, %c0_25] : memref<1x32x384xf32, #tpu.memory_space<vmem>>, vector<1x32x384xf32>
    %71 = vector.shape_cast %70 : vector<1x32x384xf32> to vector<32x384xf32>
    %72 = vector.shape_cast %69 : vector<32x384xf32> to vector<1x32x384xf32>
    tpu.vector_store %arg7[%c0_23, %c0_24, %c0_25], %72 {strides = array<i32>} : memref<1x32x384xf32, #tpu.memory_space<vmem>>, vector<1x32x384xf32>,
    return
  }
  func.func @transform_0(%arg0: i32) -> (i32, i32, i32) {
    %c0_i32 = arith.constant 0 : i32
    %c0_i32_0 = arith.constant 0 : i32
    %c0_i32_1 = arith.constant 0 : i32
    return %arg0, %c0_i32, %c0_i32_0 : i32, i32, i32
  }
  func.func @transform_1(%arg0: i32) -> (i32, i32) {
    %c0_i32 = arith.constant 0 : i32
    %c0_i32_0 = arith.constant 0 : i32
    %c0_i32_1 = arith.constant 0 : i32
    return %c0_i32, %c0_i32_0 : i32, i32
  }
  func.func @transform_2(%arg0: i32) -> (i32, i32) {
    %c0_i32 = arith.constant 0 : i32
    %c0_i32_0 = arith.constant 0 : i32
    %c0_i32_1 = arith.constant 0 : i32
    return %c0_i32, %c0_i32_0 : i32, i32
  }
  func.func @transform_3(%arg0: i32) -> (i32, i32) {
    %c0_i32 = arith.constant 0 : i32
    %c0_i32_0 = arith.constant 0 : i32
    %c0_i32_1 = arith.constant 0 : i32
    return %c0_i32, %c0_i32_0 : i32, i32
  }
  func.func @transform_4(%arg0: i32) -> (i32, i32) {
    %c0_i32 = arith.constant 0 : i32
    %c0_i32_0 = arith.constant 0 : i32
    %c0_i32_1 = arith.constant 0 : i32
    return %c0_i32, %c0_i32_0 : i32, i32
  }
  func.func @transform_5(%arg0: i32) -> (i32, i32) {
    %c0_i32 = arith.constant 0 : i32
    %c0_i32_0 = arith.constant 0 : i32
    %c0_i32_1 = arith.constant 0 : i32
    return %c0_i32, %c0_i32_0 : i32, i32
  }
  func.func @transform_6(%arg0: i32) -> (i32, i32, i32) {
    %c0_i32 = arith.constant 0 : i32
    %c0_i32_0 = arith.constant 0 : i32
    %c0_i32_1 = arith.constant 0 : i32
    return %arg0, %c0_i32, %c0_i32_0 : i32, i32, i32
  }
}

</mosaic_0001>

<llo_original>
// kernel: tpu_custom_call.1
$region0: #{tpu_custom_call.1}
  #allocation0 [shape = 'u32[]', space=smem, size = 0x4, offset = 0x4, fixed_abs, tag = 'smem constant byte address 0x4 - core index']
  #allocation1 [shape = 'u32[144,128]{1,0:T(1,128)}', space=vmem, size = 0x12000, scoped, tag = 'internal scratch']
  %s0 = inlined_call_operand.hbm [shape: bf16[2,32,512], index: 0, kind: input, shape index: {}]
  %s1 = inlined_call_operand.vmem [shape: bf16[32,288], index: 1, kind: input, shape index: {}]
  %s2 = inlined_call_operand.vmem [shape: f32[32,1], index: 2, kind: input, shape index: {}]
  %s3 = inlined_call_operand.vmem [shape: bf16[16,32], index: 3, kind: input, shape index: {}]
  %s4 = inlined_call_operand.vmem [shape: f32[16,1], index: 4, kind: input, shape index: {}]
  %s5 = inlined_call_operand.hbm [shape: f32[12,384], index: 5, kind: input, shape index: {}]
  %s6 = inlined_call_operand.hbm [shape: f32[2,32,384], index: 6, kind: output, shape index: {}]
  %s7 = sld [smem:[#allocation0]]
  $region65: #{tpu_custom_call.1} parent=0
    _
  %s9 = ssub.s32 1, %s7
  %s10 = scalar_select 0, %s9, %s7
  $region1: #{tpu_custom_call.1} parent=0
    #allocation2 [shape = 'u8[65536]{0}', space=vmem, size = 0x10000, scoped, tag = 'input window, operand 0']
    #allocation3 [shape = 's32[2]{0}', space=sflag, size = 0x8, scoped, tag = 'scoped memory for tpu_custom_call.1']
    #allocation4 [shape = 's32[2]{0}', space=sflag, size = 0x8, scoped, tag = 'scoped memory for tpu_custom_call.1']
    #allocation5 [shape = 'u8[24576]{0}', space=vmem, size = 0x6000, scoped, tag = 'input window, operand 5, single buffered']
    #allocation6 [shape = 's32[1]{0}', space=sflag, size = 0x4, scoped, tag = 'scoped memory for tpu_custom_call.1']
    #allocation7 [shape = 'u8[98304]{0}', space=vmem, size = 0x18000, scoped, tag = 'output window, operand 0']
    %11 = vsyncpa [#allocation3], 0
    %s12 = scalar_lea.sflag [#allocation3], 1
    %13 = vsyncpa %s12, 0
    %14 = vsyncpa [#allocation6], 0
    %15 = vsyncpa [#allocation4], 0
    %s16 = scalar_lea.sflag [#allocation4], 1
    %17 = vsyncpa %s16, 0
    loop: start=0, step=1, limit=4
    $region2: #{tpu_custom_call.1} parent=1 // loop_pre_header
      _
    $region3: #{tpu_custom_call.1} parent=1 // loop_header
      %s19 = sphi 0, %s23
      %p20 = scmp.ge.s32.totalorder %s19, 4
      %s29 = sphi 0, %s31
      %s32 = sphi 0, %s29
      %s33 = sphi 0, %s32
      %s49 = sphi 0, %s33
      %s53 = sphi 0, %s53
      %s55 = sphi 0, %s53
      %s56 = sphi 0, %s55
      %s70 = sphi 0, %s56
      %s74 = sphi 0, %s74
      %s76 = sphi 0, %s74
      %s77 = sphi 0, %s76
      %s91 = sphi 0, %s77
      %s95 = sphi 0, %s95
      %s97 = sphi 0, %s95
      %s98 = sphi 0, %s97
      %s112 = sphi 0, %s98
      %s116 = sphi 0, %s116
      %s118 = sphi 0, %s116
      %s119 = sphi 0, %s118
      %s133 = sphi 0, %s119
      %s137 = sphi 0, %s137
      %s139 = sphi 0, %s137
      %s140 = sphi 0, %s139
      %s154 = sphi 0, %s140
      %s160 = sphi 0, %s162
      %s163 = sphi 0, %s160
      %s164 = sphi 0, %s163
      %s180 = sphi 0, %s164
    $region4: #{tpu_custom_call.1} parent=1 // loop_header_branch
      %22 = sbr.rel (%p20) target = $region8
    $region5: #{tpu_custom_call.1} parent=1 // loop_body
      %s24 = ssub.s32 %s19, 1
      %s25 = ssub.s32 %s19, 2
      %s26 = sadd.s32 %s19, 1
      %s27 = ssub.s32 %s19, %s26
      %p28 = scmp.eq.s32.totalorder %s27, 0
      %s30 = sadd.s32 %s29, 1
      %s31 = scalar_select %p28, %s29, %s30
      %p34 = pneg %p28
      %p35 = scmp.eq.s32.totalorder %s19, 1
      %p36 = por %p34, %p35
      %p37 = scmp.ne.s32.totalorder %s29, %s32
      %p38 = scmp.eq.s32.totalorder %s19, 0
      %p39 = por %p37, %p38
      %p40 = scmp.ne.s32.totalorder %s29, %s32
      %p41 = scmp.eq.s32.totalorder %s24, 1
      %p42 = por %p40, %p41
      %p43 = scmp.ne.s32.totalorder %s32, %s33
      %p44 = scmp.eq.s32.totalorder %s24, 0
      %p45 = por %p43, %p44
      %p46 = scmp.ne.s32.totalorder %s32, %s33
      %p47 = scmp.eq.s32.totalorder %s25, 1
      %p48 = por %p46, %p47
      %p50 = scmp.ne.s32.totalorder %s33, %s49
      %p51 = scmp.eq.s32.totalorder %s25, 0
      %p52 = por %p50, %p51
      %s54 = sadd.s32 %s53, 1
      %p57 = scmp.eq.s32.totalorder %s19, 1
      %p58 = scmp.ne.s32.totalorder %s53, %s55
      %p59 = scmp.eq.s32.totalorder %s19, 0
      %p60 = por %p58, %p59
      %p61 = scmp.ne.s32.totalorder %s53, %s55
      %p62 = scmp.eq.s32.totalorder %s24, 1
      %p63 = por %p61, %p62
      %p64 = scmp.ne.s32.totalorder %s55, %s56
      %p65 = scmp.eq.s32.totalorder %s24, 0
      %p66 = por %p64, %p65
      %p67 = scmp.ne.s32.totalorder %s55, %s56
      %p68 = scmp.eq.s32.totalorder %s25, 1
      %p69 = por %p67, %p68
      %p71 = scmp.ne.s32.totalorder %s56, %s70
      %p72 = scmp.eq.s32.totalorder %s25, 0
      %p73 = por %p71, %p72
      %s75 = sadd.s32 %s74, 1
      %p78 = scmp.eq.s32.totalorder %s19, 1
      %p79 = scmp.ne.s32.totalorder %s74, %s76
      %p80 = scmp.eq.s32.totalorder %s19, 0
      %p81 = por %p79, %p80
      %p82 = scmp.ne.s32.totalorder %s74, %s76
      %p83 = scmp.eq.s32.totalorder %s24, 1
      %p84 = por %p82, %p83
      %p85 = scmp.ne.s32.totalorder %s76, %s77
      %p86 = scmp.eq.s32.totalorder %s24, 0
      %p87 = por %p85, %p86
      %p88 = scmp.ne.s32.totalorder %s76, %s77
      %p89 = scmp.eq.s32.totalorder %s25, 1
      %p90 = por %p88, %p89
      %p92 = scmp.ne.s32.totalorder %s77, %s91
      %p93 = scmp.eq.s32.totalorder %s25, 0
      %p94 = por %p92, %p93
      %s96 = sadd.s32 %s95, 1
      %p99 = scmp.eq.s32.totalorder %s19, 1
      %p100 = scmp.ne.s32.totalorder %s95, %s97
      %p101 = scmp.eq.s32.totalorder %s19, 0
      %p102 = por %p100, %p101
      %p103 = scmp.ne.s32.totalorder %s95, %s97
      %p104 = scmp.eq.s32.totalorder %s24, 1
      %p105 = por %p103, %p104
      %p106 = scmp.ne.s32.totalorder %s97, %s98
      %p107 = scmp.eq.s32.totalorder %s24, 0
      %p108 = por %p106, %p107
      %p109 = scmp.ne.s32.totalorder %s97, %s98
      %p110 = scmp.eq.s32.totalorder %s25, 1
      %p111 = por %p109, %p110
      %p113 = scmp.ne.s32.totalorder %s98, %s112
      %p114 = scmp.eq.s32.totalorder %s25, 0
      %p115 = por %p113, %p114
      %s117 = sadd.s32 %s116, 1
      %p120 = scmp.eq.s32.totalorder %s19, 1
      %p121 = scmp.ne.s32.totalorder %s116, %s118
      %p122 = scmp.eq.s32.totalorder %s19, 0
      %p123 = por %p121, %p122
      %p124 = scmp.ne.s32.totalorder %s116, %s118
      %p125 = scmp.eq.s32.totalorder %s24, 1
      %p126 = por %p124, %p125
      %p127 = scmp.ne.s32.totalorder %s118, %s119
      %p128 = scmp.eq.s32.totalorder %s24, 0
      %p129 = por %p127, %p128
      %p130 = scmp.ne.s32.totalorder %s118, %s119
      %p131 = scmp.eq.s32.totalorder %s25, 1
      %p132 = por %p130, %p131
      %p134 = scmp.ne.s32.totalorder %s119, %s133
      %p135 = scmp.eq.s32.totalorder %s25, 0
      %p136 = por %p134, %p135
      %s138 = sadd.s32 %s137, 1
      %p141 = scmp.eq.s32.totalorder %s19, 1
      %p142 = scmp.ne.s32.totalorder %s137, %s139
      %p143 = scmp.eq.s32.totalorder %s19, 0
      %p144 = por %p142, %p143
      %p145 = scmp.ne.s32.totalorder %s137, %s139
      %p146 = scmp.eq.s32.totalorder %s24, 1
      %p147 = por %p145, %p146
      %p148 = scmp.ne.s32.totalorder %s139, %s140
      %p149 = scmp.eq.s32.totalorder %s24, 0
      %p150 = por %p148, %p149
      %p151 = scmp.ne.s32.totalorder %s139, %s140
      %p152 = scmp.eq.s32.totalorder %s25, 1
      %p153 = por %p151, %p152
      %p155 = scmp.ne.s32.totalorder %s140, %s154
      %p156 = scmp.eq.s32.totalorder %s25, 0
      %p157 = por %p155, %p156
      %s158 = ssub.s32 %s19, %s26
      %p159 = scmp.eq.s32.totalorder %s158, 0
      %s161 = sadd.s32 %s160, 1
      %s162 = scalar_select %p159, %s160, %s161
      %p165 = pneg %p159
      %p166 = scmp.eq.s32.totalorder %s19, 1
      %p167 = por %p165, %p166
      %p168 = scmp.ne.s32.totalorder %s160, %s163
      %p169 = scmp.eq.s32.totalorder %s19, 0
      %p170 = por %p168, %p169
      %p171 = scmp.ne.s32.totalorder %s160, %s163
      %p172 = scmp.eq.s32.totalorder %s24, 1
      %p173 = por %p171, %p172
      %p174 = scmp.ne.s32.totalorder %s163, %s164
      %p175 = scmp.eq.s32.totalorder %s24, 0
      %p176 = por %p174, %p175
      %p177 = scmp.ne.s32.totalorder %s163, %s164
      %p178 = scmp.eq.s32.totalorder %s25, 1
      %p179 = por %p177, %p178
      %p181 = scmp.ne.s32.totalorder %s164, %s180
      %p182 = scmp.eq.s32.totalorder %s25, 0
      %p183 = por %p181, %p182
      %p184 = scmp.le.s32.totalorder 1, %s19
      %p185 = scmp.lt.s32.totalorder %s19, 3
      %p186 = pnand %p184, %p185
      %p187 = pneg %p186
      // Predicated region
      $region9: #{tpu_custom_call.1} parent=5 // pred_check
        _
      $region10: #{tpu_custom_call.1} parent=5 // pred_check_branch
        %189 = sbr.rel (%p186) target = $region12
      $region11: #{tpu_custom_call.1} parent=5 // pred_region
        %s190 = ssub.s32 %s19, 1
        // Predicated region
        $region13: #{tpu_custom_call.1} parent=11 // pred_check
          %p191 = pneg %p66
        $region14: #{tpu_custom_call.1} parent=11 // pred_check_branch
          %193 = sbr.rel (%p191) target = $region16
        $region15: #{tpu_custom_call.1} parent=11 // pred_region
          _
        $region16: #{tpu_custom_call.1} parent=11 // pred_fallthru
          _
        // Predicated region
        $region17: #{tpu_custom_call.1} parent=11 // pred_check
          %p194 = pneg %p87
        $region18: #{tpu_custom_call.1} parent=11 // pred_check_branch
          %196 = sbr.rel (%p194) target = $region20
        $region19: #{tpu_custom_call.1} parent=11 // pred_region
          _
        $region20: #{tpu_custom_call.1} parent=11 // pred_fallthru
          _
        // Predicated region
        $region21: #{tpu_custom_call.1} parent=11 // pred_check
          %p197 = pneg %p108
        $region22: #{tpu_custom_call.1} parent=11 // pred_check_branch
          %199 = sbr.rel (%p197) target = $region24
        $region23: #{tpu_custom_call.1} parent=11 // pred_region
          _
        $region24: #{tpu_custom_call.1} parent=11 // pred_fallthru
          _
        // Predicated region
        $region25: #{tpu_custom_call.1} parent=11 // pred_check
          %p200 = pneg %p129
        $region26: #{tpu_custom_call.1} parent=11 // pred_check_branch
          %202 = sbr.rel (%p200) target = $region28
        $region27: #{tpu_custom_call.1} parent=11 // pred_region
          _
        $region28: #{tpu_custom_call.1} parent=11 // pred_fallthru
          _
        // Predicated region
        $region29: #{tpu_custom_call.1} parent=11 // pred_check
          %p203 = pneg %p150
        $region30: #{tpu_custom_call.1} parent=11 // pred_check_branch
          %205 = sbr.rel (%p203) target = $region32
        $region31: #{tpu_custom_call.1} parent=11 // pred_region
          %s207 = ssub.s32 768, 768
          %208 = vsyncadd [#allocation6], %s207
          %s209 = sshll.u32 [#allocation5], 4
          %s210 = int_to_ptr.vmem [resolvable:$true] %s209
          %215 = dma.hbm_to_vmem [thread:$0]  %s5, 768, %s210, [#allocation6], 384, 384, 24
        $region32: #{tpu_custom_call.1} parent=11 // pred_fallthru
          _
      $region12: #{tpu_custom_call.1} parent=5 // pred_fallthru
        _
      %p216 = scmp.lt.s32.totalorder %s19, 2
      // Predicated region
      $region33: #{tpu_custom_call.1} parent=5 // pred_check
        %p217 = pneg %p216
      $region34: #{tpu_custom_call.1} parent=5 // pred_check_branch
        %219 = sbr.rel (%p217) target = $region36
      $region35: #{tpu_custom_call.1} parent=5 // pred_region
        // Predicated region
        $region37: #{tpu_custom_call.1} parent=35 // pred_check
          %p220 = pneg %p39
        $region38: #{tpu_custom_call.1} parent=35 // pred_check_branch
          %222 = sbr.rel (%p220) target = $region40
        $region39: #{tpu_custom_call.1} parent=35 // pred_region
          %s223 = sand.u32 %s29, 1
          %s224 = scalar_lea.sflag [#allocation3], %s223
          %s225 = sand.u32 %s29, 1
          %s226 = smul.addr %s225, 64
          %s227 = scalar_lea.vmem [#allocation2], %s226
          %s229 = ssub.s32 1024, 1024
          %230 = vsyncadd %s224, %s229
          %s231 = smul.addr %s19, 16
          %s232 = smul.addr %s231, 64
          %s233 = scalar_lea.hbm %s0, %s232
          %s234 = sshll.u32 %s227, 4
          %s235 = int_to_ptr.vmem [resolvable:$true] %s234
          %240 = dma.hbm_to_vmem [thread:$0]  %s233, 1024, %s235, %s224, 256, 256, 16
        $region40: #{tpu_custom_call.1} parent=35 // pred_fallthru
          _
      $region36: #{tpu_custom_call.1} parent=5 // pred_fallthru
        _
      %p241 = scmp.le.s32.totalorder 1, %s19
      %p242 = scmp.lt.s32.totalorder %s19, 3
      %p243 = pnand %p241, %p242
      %p244 = pneg %p243
      // Predicated region
      $region41: #{tpu_custom_call.1} parent=5 // pred_check
        _
      $region42: #{tpu_custom_call.1} parent=5 // pred_check_branch
        %246 = sbr.rel (%p243) target = $region44
      $region43: #{tpu_custom_call.1} parent=5 // pred_region
        %s247 = ssub.s32 %s19, 1
        %s248 = sand.u32 %s32, 1
        %s249 = scalar_lea.sflag [#allocation3], %s248
        %s250 = sand.u32 %s32, 1
        %s251 = smul.addr %s250, 64
        %s252 = scalar_lea.vmem [#allocation2], %s251
        // Predicated region
        $region45: #{tpu_custom_call.1} parent=43 // pred_check
          %p253 = pneg %p45
        $region46: #{tpu_custom_call.1} parent=43 // pred_check_branch
          %255 = sbr.rel (%p253) target = $region48
        $region47: #{tpu_custom_call.1} parent=43 // pred_region
          %256 = dma.done %s249, 1024
        $region48: #{tpu_custom_call.1} parent=43 // pred_fallthru
          _
        // Predicated region
        $region49: #{tpu_custom_call.1} parent=43 // pred_check
          %p257 = pneg %p150
        $region50: #{tpu_custom_call.1} parent=43 // pred_check_branch
          %259 = sbr.rel (%p257) target = $region52
        $region51: #{tpu_custom_call.1} parent=43 // pred_region
          %260 = dma.done [#allocation6], 768
        $region52: #{tpu_custom_call.1} parent=43 // pred_fallthru
          _
        %s261 = sand.u32 %s32, 1
        %s262 = scalar_lea.sflag [#allocation3], %s261
        %s263 = sand.u32 %s32, 1
        %s264 = smul.addr %s263, 64
        %s265 = scalar_lea.vmem [#allocation2], %s264
        %p266 = pneg %p45
        %p267 = pneg %p42
        %p268 = pneg %p66
        %p269 = pneg %p63
        %p270 = pneg %p87
        %p271 = pneg %p84
        %p272 = pneg %p108
        %p273 = pneg %p105
        %p274 = pneg %p129
        %p275 = pneg %p126
        %p276 = pneg %p150
        %p277 = pneg %p147
        %p278 = pneg %p176
        %p279 = pneg %p173
        %s280 = sand.u32 %s163, 1
        %s281 = scalar_lea.sflag [#allocation4], %s280
        %s282 = sand.u32 %s163, 1
        %s283 = smul.addr %s282, 96
        %s284 = scalar_lea.vmem [#allocation7], %s283
        %v286 = vld [vmem:[%s252] sm:$0xff]
        %v287 = vld [vmem:[%s252 + $0x8] sm:$0xff]
        %v288 = vld [vmem:[%s252 + $0x10] sm:$0xff]
        %v289 = vld [vmem:[%s252 + $0x18] sm:$0xff]
        %v290 = vld [vmem:[%s252 + $0x20] sm:$0xff]
        %v291 = vld [vmem:[%s252 + $0x28] sm:$0xff]
        %v292 = vld [vmem:[%s252 + $0x30] sm:$0xff]
        %v293 = vld [vmem:[%s252 + $0x38] sm:$0xff]
        %v302 = vunpack.c.l.b16 %v286
        %v303 = vunpack.c.h.b16 %v286
        %v304 = vunpack.c.l.b16 %v287
        %v305 = vunpack.c.l.b16 %v288
        %v306 = vunpack.c.h.b16 %v288
        %v307 = vunpack.c.l.b16 %v289
        %v308 = vunpack.c.l.b16 %v290
        %v309 = vunpack.c.h.b16 %v290
        %v310 = vunpack.c.l.b16 %v291
        %v311 = vunpack.c.l.b16 %v292
        %v312 = vunpack.c.h.b16 %v292
        %v313 = vunpack.c.l.b16 %v293
        %v314 = vpack.c.b16 %v305, %v302
        %v315 = vpack.c.b16 %v306, %v303
        %v316 = vpack.c.b16 %v307, %v304
        %v317 = vpack.c.b16 %v311, %v308
        %v318 = vpack.c.b16 %v312, %v309
        %v319 = vpack.c.b16 %v313, %v310
        %v326 = vunpack.c.h.b16 %v287
        %v327 = vunpack.c.h.b16 %v289
        %v328 = vunpack.c.h.b16 %v291
        %v329 = vunpack.c.h.b16 %v293
        %v330 = vpack.c.b16 %v327, %v326
        %v331 = vpack.c.b16 %v329, %v328
        %332 = vrot.lane.b32.xlu0 %v314, 127
        %v333 = vpop.permute.xlu0 %332
        %334 = vrot.lane.b32.xlu0 %v315, 127
        %v335 = vpop.permute.xlu0 %334
        %336 = vrot.lane.b32.xlu0 %v316, 127
        %v337 = vpop.permute.xlu0 %336
        %338 = vrot.lane.b32.xlu0 %v330, 127
        %v339 = vpop.permute.xlu0 %338
        %340 = vrot.lane.b32.xlu0 %v317, 127
        %v341 = vpop.permute.xlu0 %340
        %342 = vrot.lane.b32.xlu0 %v318, 127
        %v343 = vpop.permute.xlu0 %342
        %344 = vrot.lane.b32.xlu0 %v319, 127
        %v345 = vpop.permute.xlu0 %344
        %346 = vrot.lane.b32.xlu0 %v331, 127
        %v347 = vpop.permute.xlu0 %346
        %vm348 = vcmask 1039360
        %v349 = vsel %vm348, %v333, %v335
        %v350 = vsel %vm348, %v335, %v337
        %v351 = vsel %vm348, %v337, %v339
        %v352 = vsel %vm348, %v341, %v343
        %v353 = vsel %vm348, %v343, %v345
        %v354 = vsel %vm348, %v345, %v347
        %361 = vrot.lane.b32.xlu0 %v314, 126
        %v362 = vpop.permute.xlu0 %361
        %363 = vrot.lane.b32.xlu0 %v315, 126
        %v364 = vpop.permute.xlu0 %363
        %365 = vrot.lane.b32.xlu0 %v316, 126
        %v366 = vpop.permute.xlu0 %365
        %367 = vrot.lane.b32.xlu0 %v330, 126
        %v368 = vpop.permute.xlu0 %367
        %369 = vrot.lane.b32.xlu0 %v317, 126
        %v370 = vpop.permute.xlu0 %369
        %371 = vrot.lane.b32.xlu0 %v318, 126
        %v372 = vpop.permute.xlu0 %371
        %373 = vrot.lane.b32.xlu0 %v319, 126
        %v374 = vpop.permute.xlu0 %373
        %375 = vrot.lane.b32.xlu0 %v331, 126
        %v376 = vpop.permute.xlu0 %375
        %vm377 = vcmask 1031168
        %v378 = vsel %vm377, %v362, %v364
        %v379 = vsel %vm377, %v364, %v366
        %v380 = vsel %vm377, %v366, %v368
        %v381 = vsel %vm377, %v370, %v372
        %v382 = vsel %vm377, %v372, %v374
        %v383 = vsel %vm377, %v374, %v376
        %390 = vrot.lane.b32.xlu0 %v314, 110
        %v391 = vpop.permute.xlu0 %390
        %392 = vrot.lane.b32.xlu0 %v315, 110
        %v393 = vpop.permute.xlu0 %392
        %394 = vrot.lane.b32.xlu0 %v316, 110
        %v395 = vpop.permute.xlu0 %394
        %396 = vrot.lane.b32.xlu0 %v330, 110
        %v397 = vpop.permute.xlu0 %396
        %398 = vrot.lane.b32.xlu0 %v317, 110
        %v399 = vpop.permute.xlu0 %398
        %400 = vrot.lane.b32.xlu0 %v318, 110
        %v401 = vpop.permute.xlu0 %400
        %402 = vrot.lane.b32.xlu0 %v319, 110
        %v403 = vpop.permute.xlu0 %402
        %404 = vrot.lane.b32.xlu0 %v331, 110
        %v405 = vpop.permute.xlu0 %404
        %vm406 = vcmask 900096
        %v407 = vsel %vm406, %v391, %v393
        %v408 = vsel %vm406, %v393, %v395
        %v409 = vsel %vm406, %v395, %v397
        %v410 = vsel %vm406, %v399, %v401
        %v411 = vsel %vm406, %v401, %v403
        %v412 = vsel %vm406, %v403, %v405
        %419 = vrot.lane.b32.xlu0 %v314, 109
        %v420 = vpop.permute.xlu0 %419
        %421 = vrot.lane.b32.xlu0 %v315, 109
        %v422 = vpop.permute.xlu0 %421
        %423 = vrot.lane.b32.xlu0 %v316, 109
        %v424 = vpop.permute.xlu0 %423
        %425 = vrot.lane.b32.xlu0 %v330, 109
        %v426 = vpop.permute.xlu0 %425
        %427 = vrot.lane.b32.xlu0 %v317, 109
        %v428 = vpop.permute.xlu0 %427
        %429 = vrot.lane.b32.xlu0 %v318, 109
        %v430 = vpop.permute.xlu0 %429
        %431 = vrot.lane.b32.xlu0 %v319, 109
        %v432 = vpop.permute.xlu0 %431
        %433 = vrot.lane.b32.xlu0 %v331, 109
        %v434 = vpop.permute.xlu0 %433
        %vm435 = vcmask 891904
        %v436 = vsel %vm435, %v420, %v422
        %v437 = vsel %vm435, %v422, %v424
        %v438 = vsel %vm435, %v424, %v426
        %v439 = vsel %vm435, %v428, %v430
        %v440 = vsel %vm435, %v430, %v432
        %v441 = vsel %vm435, %v432, %v434
        %448 = vrot.lane.b32.xlu0 %v314, 108
        %v449 = vpop.permute.xlu0 %448
        %450 = vrot.lane.b32.xlu0 %v315, 108
        %v451 = vpop.permute.xlu0 %450
        %452 = vrot.lane.b32.xlu0 %v316, 108
        %v453 = vpop.permute.xlu0 %452
        %454 = vrot.lane.b32.xlu0 %v330, 108
        %v455 = vpop.permute.xlu0 %454
        %456 = vrot.lane.b32.xlu0 %v317, 108
        %v457 = vpop.permute.xlu0 %456
        %458 = vrot.lane.b32.xlu0 %v318, 108
        %v459 = vpop.permute.xlu0 %458
        %460 = vrot.lane.b32.xlu0 %v319, 108
        %v461 = vpop.permute.xlu0 %460
        %462 = vrot.lane.b32.xlu0 %v331, 108
        %v463 = vpop.permute.xlu0 %462
        %vm464 = vcmask 883712
        %v465 = vsel %vm464, %v449, %v451
        %v466 = vsel %vm464, %v451, %v453
        %v467 = vsel %vm464, %v453, %v455
        %v468 = vsel %vm464, %v457, %v459
        %v469 = vsel %vm464, %v459, %v461
        %v470 = vsel %vm464, %v461, %v463
        %477 = vrot.lane.b32.xlu0 %v314, 92
        %v478 = vpop.permute.xlu0 %477
        %479 = vrot.lane.b32.xlu0 %v315, 92
        %v480 = vpop.permute.xlu0 %479
        %481 = vrot.lane.b32.xlu0 %v316, 92
        %v482 = vpop.permute.xlu0 %481
        %483 = vrot.lane.b32.xlu0 %v330, 92
        %v484 = vpop.permute.xlu0 %483
        %485 = vrot.lane.b32.xlu0 %v317, 92
        %v486 = vpop.permute.xlu0 %485
        %487 = vrot.lane.b32.xlu0 %v318, 92
        %v488 = vpop.permute.xlu0 %487
        %489 = vrot.lane.b32.xlu0 %v319, 92
        %v490 = vpop.permute.xlu0 %489
        %491 = vrot.lane.b32.xlu0 %v331, 92
        %v492 = vpop.permute.xlu0 %491
        %vm493 = vcmask 752640
        %v494 = vsel %vm493, %v478, %v480
        %v495 = vsel %vm493, %v480, %v482
        %v496 = vsel %vm493, %v482, %v484
        %v497 = vsel %vm493, %v486, %v488
        %v498 = vsel %vm493, %v488, %v490
        %v499 = vsel %vm493, %v490, %v492
        %506 = vrot.lane.b32.xlu0 %v314, 91
        %v507 = vpop.permute.xlu0 %506
        %508 = vrot.lane.b32.xlu0 %v315, 91
        %v509 = vpop.permute.xlu0 %508
        %510 = vrot.lane.b32.xlu0 %v316, 91
        %v511 = vpop.permute.xlu0 %510
        %512 = vrot.lane.b32.xlu0 %v330, 91
        %v513 = vpop.permute.xlu0 %512
        %514 = vrot.lane.b32.xlu0 %v317, 91
        %v515 = vpop.permute.xlu0 %514
        %516 = vrot.lane.b32.xlu0 %v318, 91
        %v517 = vpop.permute.xlu0 %516
        %518 = vrot.lane.b32.xlu0 %v319, 91
        %v519 = vpop.permute.xlu0 %518
        %520 = vrot.lane.b32.xlu0 %v331, 91
        %v521 = vpop.permute.xlu0 %520
        %vm522 = vcmask 744448
        %v523 = vsel %vm522, %v507, %v509
        %v524 = vsel %vm522, %v509, %v511
        %v525 = vsel %vm522, %v511, %v513
        %v526 = vsel %vm522, %v515, %v517
        %v527 = vsel %vm522, %v517, %v519
        %v528 = vsel %vm522, %v519, %v521
        %535 = vrot.lane.b32.xlu0 %v314, 90
        %v536 = vpop.permute.xlu0 %535
        %537 = vrot.lane.b32.xlu0 %v315, 90
        %v538 = vpop.permute.xlu0 %537
        %539 = vrot.lane.b32.xlu0 %v316, 90
        %v540 = vpop.permute.xlu0 %539
        %541 = vrot.lane.b32.xlu0 %v330, 90
        %v542 = vpop.permute.xlu0 %541
        %543 = vrot.lane.b32.xlu0 %v317, 90
        %v544 = vpop.permute.xlu0 %543
        %545 = vrot.lane.b32.xlu0 %v318, 90
        %v546 = vpop.permute.xlu0 %545
        %547 = vrot.lane.b32.xlu0 %v319, 90
        %v548 = vpop.permute.xlu0 %547
        %549 = vrot.lane.b32.xlu0 %v331, 90
        %v550 = vpop.permute.xlu0 %549
        %vm551 = vcmask 736256
        %v552 = vsel %vm551, %v536, %v538
        %v553 = vsel %vm551, %v538, %v540
        %v554 = vsel %vm551, %v540, %v542
        %v555 = vsel %vm551, %v544, %v546
        %v556 = vsel %vm551, %v546, %v548
        %v557 = vsel %vm551, %v548, %v550
        %v564 = vld [vmem:[%s1] sm:$0xff]
        %v565 = vld [vmem:[%s1 + $0x8] sm:$0xf]
        %v566 = vld [vmem:[%s1 + $0xc] sm:$0xff]
        %v567 = vld [vmem:[%s1 + $0x14] sm:$0xf]
        %v568 = vld [vmem:[%s1 + $0x18] sm:$0xff]
        %v569 = vld [vmem:[%s1 + $0x20] sm:$0xf]
        %v570 = vld [vmem:[%s1 + $0x24] sm:$0xff]
        %v571 = vld [vmem:[%s1 + $0x2c] sm:$0xf]
        %v572 = vld [vmem:[%s2] sm:$0xff]
        %v573 = vld [vmem:[%s2 + $0x8] sm:$0xff]
        %v574 = vld [vmem:[%s2 + $0x10] sm:$0xff]
        %v575 = vld [vmem:[%s2 + $0x18] sm:$0xff]
        %577 = vset.pattern.permute.xlu0 0
        %578 = vperm.xlu0 %577, %v572
        %v579 = vpop.permute.xlu0 %578
        %582 = vset.pattern.permute.xlu0 0
        %583 = vperm.xlu0 %582, %v573
        %v584 = vpop.permute.xlu0 %583
        %587 = vset.pattern.permute.xlu0 0
        %588 = vperm.xlu0 %587, %v574
        %v589 = vpop.permute.xlu0 %588
        %592 = vset.pattern.permute.xlu0 0
        %593 = vperm.xlu0 %592, %v575
        %v594 = vpop.permute.xlu0 %593
        %v604 = vunpack.c.l.b16 %v564
        %v605 = vunpack.c.h.b16 %v564
        %v606 = vunpack.c.l.b16 %v565
        %v607 = vunpack.c.l.b16 %v566
        %v608 = vunpack.c.h.b16 %v566
        %v609 = vunpack.c.l.b16 %v567
        %v610 = vunpack.c.l.b16 %v568
        %v611 = vunpack.c.h.b16 %v568
        %v612 = vunpack.c.l.b16 %v569
        %v613 = vunpack.c.l.b16 %v570
        %v614 = vunpack.c.h.b16 %v570
        %v615 = vunpack.c.l.b16 %v571
        %v616 = vpack.c.b16 %v607, %v604
        %v617 = vpack.c.b16 %v608, %v605
        %v618 = vpack.c.b16 %v609, %v606
        %v619 = vpack.c.b16 %v613, %v610
        %v620 = vpack.c.b16 %v614, %v611
        %v621 = vpack.c.b16 %v615, %v612
        %vm626 = vcmask 261120
        %v628 = vsel %vm626, %v618, 0
        %v631 = vsel %vm626, %v621, 0
        %633 = vmatprep.subr.bf16.mxu0 %v315
        %634 = vmatpush1.bf16.msra.mxu0 %v314
        %635 = vmatprep.subr.bf16.mxu0 %v318
        %636 = vmatpush1.bf16.msra.mxu0 %v317
        %637 = vmatprep.subr.bf16.mxu0 %v350
        %638 = vmatpush1.bf16.msra.mxu0 %v349
        %639 = vmatprep.subr.bf16.mxu0 %v353
        %640 = vmatpush1.bf16.msra.mxu0 %v352
        %641 = vmatprep.subr.bf16.mxu0 %v379
        %642 = vmatpush1.bf16.msra.mxu0 %v378
        %643 = vmatprep.subr.bf16.mxu0 %v382
        %644 = vmatpush1.bf16.msra.mxu0 %v381
        %645 = vmatprep.subr.bf16.mxu0 %v408
        %646 = vmatpush1.bf16.msra.mxu0 %v407
        %647 = vmatprep.subr.bf16.mxu0 %v411
        %648 = vmatpush1.bf16.msra.mxu0 %v410
        %649 = vmatprep.subr.bf16.mxu0 %v437
        %650 = vmatpush1.bf16.msra.mxu0 %v436
        %651 = vmatprep.subr.bf16.mxu0 %v440
        %652 = vmatpush1.bf16.msra.mxu0 %v439
        %653 = vmatprep.subr.bf16.mxu0 %v466
        %654 = vmatpush1.bf16.msra.mxu0 %v465
        %655 = vmatprep.subr.bf16.mxu0 %v469
        %656 = vmatpush1.bf16.msra.mxu0 %v468
        %657 = vmatprep.subr.bf16.mxu0 %v495
        %658 = vmatpush1.bf16.msra.mxu0 %v494
        %659 = vmatprep.subr.bf16.mxu0 %v498
        %660 = vmatpush1.bf16.msra.mxu0 %v497
        %661 = vmatprep.subr.bf16.mxu0 %v524
        %662 = vmatpush1.bf16.msra.mxu0 %v523
        %663 = vmatprep.subr.bf16.mxu0 %v527
        %664 = vmatpush1.bf16.msra.mxu0 %v526
        %665 = vmatprep.mubr.bf16.mxu0 %v617
        %666 = vmatmul.mubr.bf16.gmra.mrb[0].mxu0 %v616
        %v667 = vpop.f32.mrb[0].mxu0
        %v668 = vadd.f32 %v579, %v667
        %v669 = vpop.f32.mrb[0].mxu0
        %v670 = vadd.f32 %v579, %v669
        %v671 = vpop.f32.mrb[0].mxu0
        %v672 = vadd.f32 %v584, %v671
        %v673 = vpop.f32.mrb[0].mxu0
        %v674 = vadd.f32 %v584, %v673
        %675 = vmatprep.mubr.bf16.mxu0 %v620
        %676 = vmatmul.mubr.bf16.gmra.mrb[0].mxu0 %v619
        %v677 = vpop.f32.mrb[0].mxu0
        %v678 = vadd.f32 %v589, %v677
        %v679 = vpop.f32.mrb[0].mxu0
        %v680 = vadd.f32 %v589, %v679
        %v681 = vpop.f32.mrb[0].mxu0
        %v682 = vadd.f32 %v594, %v681
        %v683 = vpop.f32.mrb[0].mxu0
        %v684 = vadd.f32 %v594, %v683
        %685 = vdwg.mxu0
        %686 = vmatprep.subr.bf16.mxu0 %v553
        %687 = vmatpush1.bf16.msra.mxu0 %v552
        %688 = vmatprep.subr.bf16.mxu0 %v556
        %689 = vmatpush1.bf16.msra.mxu0 %v555
        %690 = vmatprep.subr.bf16.mxu0 0
        %691 = vmatpush1.bf16.msra.mxu0 0
        %692 = vmatprep.subr.bf16.mxu0 0
        %693 = vmatpush1.bf16.msra.mxu0 0
        %694 = vmatprep.subr.bf16.mxu0 0
        %695 = vmatpush1.bf16.msra.mxu0 0
        %696 = vmatprep.subr.bf16.mxu0 0
        %697 = vmatpush1.bf16.msra.mxu0 0
        %698 = vmatprep.subr.bf16.mxu0 0
        %699 = vmatpush1.bf16.msra.mxu0 0
        %700 = vmatprep.subr.bf16.mxu0 0
        %701 = vmatpush1.bf16.msra.mxu0 0
        %702 = vmatprep.subr.bf16.mxu0 0
        %703 = vmatpush1.bf16.msra.mxu0 0
        %704 = vmatprep.subr.bf16.mxu0 0
        %705 = vmatpush1.bf16.msra.mxu0 0
        %706 = vmatprep.subr.bf16.mxu0 0
        %707 = vmatpush1.bf16.msra.mxu0 0
        %708 = vmatprep.subr.bf16.mxu0 0
        %709 = vmatpush1.bf16.msra.mxu0 0
        %710 = vmatprep.subr.bf16.mxu0 0
        %711 = vmatpush1.bf16.msra.mxu0 0
        %712 = vmatprep.subr.bf16.mxu0 0
        %713 = vmatpush1.bf16.msra.mxu0 0
        %714 = vmatprep.subr.bf16.mxu0 0
        %715 = vmatpush1.bf16.msra.mxu0 0
        %716 = vmatprep.subr.bf16.mxu0 0
        %717 = vmatpush1.bf16.msra.mxu0 0
        %718 = vmatprep.mubr.bf16.mxu0 0
        %719 = vmatmul.mubr.bf16.gmra.mrb[0].mxu0 %v628
        %v720 = vpop.f32.mrb[0].mxu0
        %v721 = vadd.f32 %v668, %v720
        %v722 = vpop.f32.mrb[0].mxu0
        %v723 = vadd.f32 %v670, %v722
        %v724 = vpop.f32.mrb[0].mxu0
        %v725 = vadd.f32 %v672, %v724
        %v726 = vpop.f32.mrb[0].mxu0
        %v727 = vadd.f32 %v674, %v726
        %728 = vmatprep.mubr.bf16.mxu0 0
        %729 = vmatmul.mubr.bf16.gmra.mrb[0].mxu0 %v631
        %v730 = vpop.f32.mrb[0].mxu0
        %v731 = vadd.f32 %v678, %v730
        %v732 = vpop.f32.mrb[0].mxu0
        %v733 = vadd.f32 %v680, %v732
        %v734 = vpop.f32.mrb[0].mxu0
        %v735 = vadd.f32 %v682, %v734
        %v736 = vpop.f32.mrb[0].mxu0
        %v737 = vadd.f32 %v684, %v736
        %738 = vdwg.mxu0
        %739 = vmatprep.subr.bf16.mxu0 0
        %740 = vmatpush1.bf16.msra.mxu0 %v316
        %741 = vmatprep.subr.bf16.mxu0 0
        %742 = vmatpush1.bf16.msra.mxu0 %v319
        %743 = vmatprep.subr.bf16.mxu0 0
        %744 = vmatpush1.bf16.msra.mxu0 %v351
        %745 = vmatprep.subr.bf16.mxu0 0
        %746 = vmatpush1.bf16.msra.mxu0 %v354
        %747 = vmatprep.subr.bf16.mxu0 0
        %748 = vmatpush1.bf16.msra.mxu0 %v380
        %749 = vmatprep.subr.bf16.mxu0 0
        %750 = vmatpush1.bf16.msra.mxu0 %v383
        %751 = vmatprep.subr.bf16.mxu0 0
        %752 = vmatpush1.bf16.msra.mxu0 %v409
        %753 = vmatprep.subr.bf16.mxu0 0
        %754 = vmatpush1.bf16.msra.mxu0 %v412
        %755 = vmatprep.subr.bf16.mxu0 0
        %756 = vmatpush1.bf16.msra.mxu0 %v438
        %757 = vmatprep.subr.bf16.mxu0 0
        %758 = vmatpush1.bf16.msra.mxu0 %v441
        %759 = vmatprep.subr.bf16.mxu0 0
        %760 = vmatpush1.bf16.msra.mxu0 %v467
        %761 = vmatprep.subr.bf16.mxu0 0
        %762 = vmatpush1.bf16.msra.mxu0 %v470
        %763 = vmatprep.subr.bf16.mxu0 0
        %764 = vmatpush1.bf16.msra.mxu0 %v496
        %765 = vmatprep.subr.bf16.mxu0 0
        %766 = vmatpush1.bf16.msra.mxu0 %v499
        %767 = vmatprep.subr.bf16.mxu0 0
        %768 = vmatpush1.bf16.msra.mxu0 %v525
        %769 = vmatprep.subr.bf16.mxu0 0
        %770 = vmatpush1.bf16.msra.mxu0 %v528
        %771 = vmatprep.mubr.bf16.mxu0 %v617
        %772 = vmatmul.mubr.bf16.gmra.mrb[0].mxu0 %v616
        %v773 = vpop.f32.mrb[0].mxu0
        %v774 = vadd.f32 %v579, %v773
        %v775 = vpop.f32.mrb[0].mxu0
        %v776 = vpop.f32.mrb[0].mxu0
        %v777 = vadd.f32 %v584, %v776
        %v778 = vpop.f32.mrb[0].mxu0
        %779 = vmatprep.mubr.bf16.mxu0 %v620
        %780 = vmatmul.mubr.bf16.gmra.mrb[0].mxu0 %v619
        %v781 = vpop.f32.mrb[0].mxu0
        %v782 = vadd.f32 %v589, %v781
        %v783 = vpop.f32.mrb[0].mxu0
        %v784 = vpop.f32.mrb[0].mxu0
        %v785 = vadd.f32 %v594, %v784
        %v786 = vpop.f32.mrb[0].mxu0
        %787 = vdwg.mxu0
        %788 = vmatprep.subr.bf16.mxu0 0
        %789 = vmatpush1.bf16.msra.mxu0 %v554
        %790 = vmatprep.subr.bf16.mxu0 0
        %791 = vmatpush1.bf16.msra.mxu0 %v557
        %792 = vmatprep.subr.bf16.mxu0 0
        %793 = vmatpush1.bf16.msra.mxu0 0
        %794 = vmatprep.subr.bf16.mxu0 0
        %795 = vmatpush1.bf16.msra.mxu0 0
        %796 = vmatprep.subr.bf16.mxu0 0
        %797 = vmatpush1.bf16.msra.mxu0 0
        %798 = vmatprep.subr.bf16.mxu0 0
        %799 = vmatpush1.bf16.msra.mxu0 0
        %800 = vmatprep.subr.bf16.mxu0 0
        %801 = vmatpush1.bf16.msra.mxu0 0
        %802 = vmatprep.subr.bf16.mxu0 0
        %803 = vmatpush1.bf16.msra.mxu0 0
        %804 = vmatprep.subr.bf16.mxu0 0
        %805 = vmatpush1.bf16.msra.mxu0 0
        %806 = vmatprep.subr.bf16.mxu0 0
        %807 = vmatpush1.bf16.msra.mxu0 0
        %808 = vmatprep.subr.bf16.mxu0 0
        %809 = vmatpush1.bf16.msra.mxu0 0
        %810 = vmatprep.subr.bf16.mxu0 0
        %811 = vmatpush1.bf16.msra.mxu0 0
        %812 = vmatprep.subr.bf16.mxu0 0
        %813 = vmatpush1.bf16.msra.mxu0 0
        %814 = vmatprep.subr.bf16.mxu0 0
        %815 = vmatpush1.bf16.msra.mxu0 0
        %816 = vmatprep.subr.bf16.mxu0 0
        %817 = vmatpush1.bf16.msra.mxu0 0
        %818 = vmatprep.subr.bf16.mxu0 0
        %819 = vmatpush1.bf16.msra.mxu0 0
        %820 = vmatprep.mubr.bf16.mxu0 0
        %821 = vmatmul.mubr.bf16.gmra.mrb[0].mxu0 %v628
        %v822 = vpop.f32.mrb[0].mxu0
        %v823 = vadd.f32 %v774, %v822
        %v824 = vpop.f32.mrb[0].mxu0
        %v825 = vpop.f32.mrb[0].mxu0
        %v826 = vadd.f32 %v777, %v825
        %v827 = vpop.f32.mrb[0].mxu0
        %828 = vmatprep.mubr.bf16.mxu0 0
        %829 = vmatmul.mubr.bf16.gmra.mrb[0].mxu0 %v631
        %v830 = vpop.f32.mrb[0].mxu0
        %v831 = vadd.f32 %v782, %v830
        %v832 = vpop.f32.mrb[0].mxu0
        %v833 = vpop.f32.mrb[0].mxu0
        %v834 = vadd.f32 %v785, %v833
        %v835 = vpop.f32.mrb[0].mxu0
        %836 = vdwg.mxu0
        %v837 = vmax.f32 %v721, 0.0
        %v838 = vmax.f32 %v723, 0.0
        %v839 = vmax.f32 %v823, 0.0
        %v840 = vmax.f32 %v725, 0.0
        %v841 = vmax.f32 %v727, 0.0
        %v842 = vmax.f32 %v826, 0.0
        %v843 = vmax.f32 %v731, 0.0
        %v844 = vmax.f32 %v733, 0.0
        %v845 = vmax.f32 %v831, 0.0
        %v846 = vmax.f32 %v735, 0.0
        %v847 = vmax.f32 %v737, 0.0
        %v848 = vmax.f32 %v834, 0.0
        %v849 = vld [vmem:[%s3] sm:$0xf]
        %v850 = vld [vmem:[%s3 + $0x4] sm:$0xf]
        %v851 = vpack.c.bf16 %v840, %v837
        %v852 = vpack.c.bf16 %v841, %v838
        %v853 = vpack.c.bf16 %v842, %v839
        %v854 = vpack.c.bf16 %v846, %v843
        %v855 = vpack.c.bf16 %v847, %v844
        %v856 = vpack.c.bf16 %v848, %v845
        %v857 = vld [vmem:[%s4] sm:$0xff]
        %v858 = vld [vmem:[%s4 + $0x8] sm:$0xff]
        %860 = vset.pattern.permute.xlu0 0
        %861 = vperm.xlu0 %860, %v857
        %v862 = vpop.permute.xlu0 %861
        %865 = vset.pattern.permute.xlu0 0
        %866 = vperm.xlu0 %865, %v858
        %v867 = vpop.permute.xlu0 %866
        %v871 = vunpack.c.l.b16 %v849
        %v872 = vunpack.c.l.b16 %v850
        %v873 = vpack.c.b16 %v872, %v871
        %v875 = vsel %vm626, %v873, 0
        %877 = vmatprep.subr.bf16.mxu0 %v852
        %878 = vmatpush1.bf16.msra.mxu0 %v851
        %879 = vmatprep.subr.bf16.mxu0 %v855
        %880 = vmatpush1.bf16.msra.mxu0 %v854
        %881 = vmatprep.subr.bf16.mxu0 0
        %882 = vmatpush1.bf16.msra.mxu0 0
        %883 = vmatprep.subr.bf16.mxu0 0
        %884 = vmatpush1.bf16.msra.mxu0 0
        %885 = vmatprep.subr.bf16.mxu0 0
        %886 = vmatpush1.bf16.msra.mxu0 0
        %887 = vmatprep.subr.bf16.mxu0 0
        %888 = vmatpush1.bf16.msra.mxu0 0
        %889 = vmatprep.subr.bf16.mxu0 0
        %890 = vmatpush1.bf16.msra.mxu0 0
        %891 = vmatprep.subr.bf16.mxu0 0
        %892 = vmatpush1.bf16.msra.mxu0 0
        %893 = vmatprep.subr.bf16.mxu0 0
        %894 = vmatpush1.bf16.msra.mxu0 0
        %895 = vmatprep.subr.bf16.mxu0 0
        %896 = vmatpush1.bf16.msra.mxu0 0
        %897 = vmatprep.subr.bf16.mxu0 0
        %898 = vmatpush1.bf16.msra.mxu0 0
        %899 = vmatprep.subr.bf16.mxu0 0
        %900 = vmatpush1.bf16.msra.mxu0 0
        %901 = vmatprep.subr.bf16.mxu0 0
        %902 = vmatpush1.bf16.msra.mxu0 0
        %903 = vmatprep.subr.bf16.mxu0 0
        %904 = vmatpush1.bf16.msra.mxu0 0
        %905 = vmatprep.subr.bf16.mxu0 0
        %906 = vmatpush1.bf16.msra.mxu0 0
        %907 = vmatprep.subr.bf16.mxu0 0
        %908 = vmatpush1.bf16.msra.mxu0 0
        %909 = vmatprep.mubr.bf16.mxu0 0
        %910 = vmatmul.mubr.bf16.gmra.mrb[0].mxu0 %v875
        %v911 = vpop.f32.mrb[0].mxu0
        %v912 = vadd.f32 %v862, %v911
        %v913 = vpop.f32.mrb[0].mxu0
        %v914 = vadd.f32 %v862, %v913
        %v915 = vpop.f32.mrb[0].mxu0
        %v916 = vadd.f32 %v867, %v915
        %v917 = vpop.f32.mrb[0].mxu0
        %v918 = vadd.f32 %v867, %v917
        %919 = vdwg.mxu0
        %920 = vmatprep.subr.bf16.mxu0 0
        %921 = vmatpush1.bf16.msra.mxu0 %v853
        %922 = vmatprep.subr.bf16.mxu0 0
        %923 = vmatpush1.bf16.msra.mxu0 %v856
        %924 = vmatprep.subr.bf16.mxu0 0
        %925 = vmatpush1.bf16.msra.mxu0 0
        %926 = vmatprep.subr.bf16.mxu0 0
        %927 = vmatpush1.bf16.msra.mxu0 0
        %928 = vmatprep.subr.bf16.mxu0 0
        %929 = vmatpush1.bf16.msra.mxu0 0
        %930 = vmatprep.subr.bf16.mxu0 0
        %931 = vmatpush1.bf16.msra.mxu0 0
        %932 = vmatprep.subr.bf16.mxu0 0
        %933 = vmatpush1.bf16.msra.mxu0 0
        %934 = vmatprep.subr.bf16.mxu0 0
        %935 = vmatpush1.bf16.msra.mxu0 0
        %936 = vmatprep.subr.bf16.mxu0 0
        %937 = vmatpush1.bf16.msra.mxu0 0
        %938 = vmatprep.subr.bf16.mxu0 0
        %939 = vmatpush1.bf16.msra.mxu0 0
        %940 = vmatprep.subr.bf16.mxu0 0
        %941 = vmatpush1.bf16.msra.mxu0 0
        %942 = vmatprep.subr.bf16.mxu0 0
        %943 = vmatpush1.bf16.msra.mxu0 0
        %944 = vmatprep.subr.bf16.mxu0 0
        %945 = vmatpush1.bf16.msra.mxu0 0
        %946 = vmatprep.subr.bf16.mxu0 0
        %947 = vmatpush1.bf16.msra.mxu0 0
        %948 = vmatprep.subr.bf16.mxu0 0
        %949 = vmatpush1.bf16.msra.mxu0 0
        %950 = vmatprep.subr.bf16.mxu0 0
        %951 = vmatpush1.bf16.msra.mxu0 0
        %952 = vmatprep.mubr.bf16.mxu0 0
        %953 = vmatmul.mubr.bf16.gmra.mrb[0].mxu0 %v875
        %v954 = vpop.f32.mrb[0].mxu0
        %v955 = vadd.f32 %v862, %v954
        %v956 = vpop.f32.mrb[0].mxu0
        %v957 = vpop.f32.mrb[0].mxu0
        %v958 = vadd.f32 %v867, %v957
        %v959 = vpop.f32.mrb[0].mxu0
        %960 = vdwg.mxu0
        %v961 = vld [vmem:[#allocation5] sm:$0xff]
        %v962 = vld [vmem:[#allocation5 + $0x8] sm:$0xff]
        %v963 = vld [vmem:[#allocation5 + $0x10] sm:$0xff]
        %v964 = vld [vmem:[#allocation5 + $0x18] sm:$0xf]
        %v965 = vld [vmem:[#allocation5 + $0x20] sm:$0xf]
        %v966 = vld [vmem:[#allocation5 + $0x28] sm:$0xf]
        %v970 = vrot.slane %v961, 2
        %v971 = vrot.slane %v962, 2
        %v972 = vrot.slane %v963, 2
        %v976 = vsub.f32 %v961, %v970
        %v977 = vsub.f32 %v962, %v971
        %v978 = vsub.f32 %v963, %v972
        %v979 = vsub.f32 %v964, %v970
        %v980 = vsub.f32 %v965, %v971
        %v981 = vsub.f32 %v966, %v972
        %v982 = vmul.f32 %v976, 0.5
        %v983 = vmul.f32 %v977, 0.5
        %v984 = vmul.f32 %v978, 0.5
        %v985 = vmul.f32 %v979, 0.5
        %v986 = vmul.f32 %v980, 0.5
        %v987 = vmul.f32 %v981, 0.5
        %vm994 = vcmask 1041408
        %v995 = vrot.slane %v982, 6
        %v996 = vrot.slane %v985, 6
        %v997 = vsel %vm994, %v995, %v996
        %v998 = vrot.slane %v983, 6
        %v999 = vrot.slane %v986, 6
        %v1000 = vsel %vm994, %v998, %v999
        %v1001 = vrot.slane %v984, 6
        %v1002 = vrot.slane %v987, 6
        %v1003 = vsel %vm994, %v1001, %v1002
        %v1007 = vadd.f32 %v961, %v997
        %v1008 = vadd.f32 %v962, %v1000
        %v1009 = vadd.f32 %v963, %v1003
        %v1013 = vadd.f32 %v961, %v996
        %v1014 = vadd.f32 %v962, %v999
        %v1015 = vadd.f32 %v963, %v1002
        %v1016 = vmin.f32 %v916, 4.1351666
        %v1017 = vmin.f32 %v918, 4.1351666
        %v1018 = vmin.f32 %v958, 4.1351666
        %vm1025 = vcmask 1044480
        %v1026 = vrot.slane %v976, 3
        %v1027 = vrot.slane %v979, 3
        %v1028 = vsel %vm1025, %v1026, %v1027
        %v1029 = vrot.slane %v977, 3
        %v1030 = vrot.slane %v980, 3
        %v1031 = vsel %vm1025, %v1029, %v1030
        %v1032 = vrot.slane %v978, 3
        %v1033 = vrot.slane %v981, 3
        %v1034 = vsel %vm1025, %v1032, %v1033
        %v1038 = vmul.f32 %v912, %v1028
        %v1039 = vmul.f32 %v914, %v1031
        %v1040 = vmul.f32 %v955, %v1034
        %v1044 = vrot.slane %v1007, 5
        %v1045 = vrot.slane %v1008, 5
        %v1046 = vrot.slane %v1009, 5
        %v1050 = vadd.f32 %v1038, %v1044
        %v1051 = vadd.f32 %v1039, %v1045
        %v1052 = vadd.f32 %v1040, %v1046
        %v1056 = vmul.f32 %v912, %v1027
        %v1057 = vmul.f32 %v914, %v1030
        %v1058 = vmul.f32 %v955, %v1033
        %v1059 = vmul.f32 %v916, %v1027
        %v1060 = vmul.f32 %v918, %v1030
        %v1061 = vmul.f32 %v958, %v1033
        %v1065 = vrot.slane %v1013, 5
        %v1066 = vrot.slane %v1014, 5
        %v1067 = vrot.slane %v1015, 5
        %v1071 = vadd.f32 %v1056, %v1065
        %v1072 = vadd.f32 %v1057, %v1066
        %v1073 = vadd.f32 %v1058, %v1067
        %v1074 = vadd.f32 %v1059, %v1065
        %v1075 = vadd.f32 %v1060, %v1066
        %v1076 = vadd.f32 %v1061, %v1067
        %v1077 = vmul.f32 %v1016, 1.442695
        %v1078 = vpow.pop %v1077
        %v1079 = vmul.f32 %v1017, 1.442695
        %v1080 = vpow.pop %v1079
        %v1081 = vmul.f32 %v1018, 1.442695
        %v1082 = vpow.pop %v1081
        %vm1083 = vcmask 1042432
        %v1084 = vrot.slane %v976, 5
        %v1085 = vrot.slane %v979, 5
        %v1086 = vsel %vm1083, %v1084, %v1085
        %v1087 = vrot.slane %v977, 5
        %v1088 = vrot.slane %v980, 5
        %v1089 = vsel %vm1083, %v1087, %v1088
        %v1090 = vrot.slane %v978, 5
        %v1091 = vrot.slane %v981, 5
        %v1092 = vsel %vm1083, %v1090, %v1091
        %v1096 = vmul.f32 %v1078, %v1086
        %v1097 = vmul.f32 %v1080, %v1089
        %v1098 = vmul.f32 %v1082, %v1092
        %v1102 = vmul.f32 %v1078, %v1085
        %v1103 = vmul.f32 %v1080, %v1088
        %v1104 = vmul.f32 %v1082, %v1091
        %v1105 = vmul.f32 %v1096, 0.5
        %v1106 = vmul.f32 %v1097, 0.5
        %v1107 = vmul.f32 %v1098, 0.5
        %v1111 = vrot.slane %v1105, 6
        %v1112 = vrot.slane %v1106, 6
        %v1113 = vrot.slane %v1107, 6
        %v1117 = vsub.f32 %v1050, %v1111
        %v1118 = vsub.f32 %v1051, %v1112
        %v1119 = vsub.f32 %v1052, %v1113
        %v1120 = vmul.f32 %v1102, 0.5
        %v1121 = vmul.f32 %v1103, 0.5
        %v1122 = vmul.f32 %v1104, 0.5
        %v1126 = vrot.slane %v1120, 6
        %v1127 = vrot.slane %v1121, 6
        %v1128 = vrot.slane %v1122, 6
        %v1132 = vsub.f32 %v1071, %v1126
        %v1133 = vsub.f32 %v1072, %v1127
        %v1134 = vsub.f32 %v1073, %v1128
        %v1135 = vsub.f32 %v1074, %v1126
        %v1136 = vsub.f32 %v1075, %v1127
        %v1137 = vsub.f32 %v1076, %v1128
        %v1138 = vadd.f32 %v1050, %v1111
        %v1139 = vadd.f32 %v1051, %v1112
        %v1140 = vadd.f32 %v1052, %v1113
        %v1141 = vadd.f32 %v1071, %v1126
        %v1142 = vadd.f32 %v1072, %v1127
        %v1143 = vadd.f32 %v1073, %v1128
        %v1144 = vadd.f32 %v1074, %v1126
        %v1145 = vadd.f32 %v1075, %v1127
        %v1146 = vadd.f32 %v1076, %v1128
        %v1150 = vrot.slane %v1117, 3
        %v1151 = vrot.slane %v1118, 3
        %v1152 = vrot.slane %v1119, 3
        %v1162 = vrot.slane %v1132, 3
        %v1163 = vrot.slane %v1135, 3
        %v1164 = vsel %vm1025, %v1162, %v1163
        %v1165 = vrot.slane %v1133, 3
        %v1166 = vrot.slane %v1136, 3
        %v1167 = vsel %vm1025, %v1165, %v1166
        %v1168 = vrot.slane %v1134, 3
        %v1169 = vrot.slane %v1137, 3
        %v1170 = vsel %vm1025, %v1168, %v1169
        %v1177 = vrot.slane %v1138, 5
        %v1178 = vrot.slane %v1139, 5
        %v1179 = vrot.slane %v1140, 5
        %v1189 = vrot.slane %v1141, 5
        %v1190 = vrot.slane %v1144, 5
        %v1191 = vsel %vm1083, %v1189, %v1190
        %v1192 = vrot.slane %v1142, 5
        %v1193 = vrot.slane %v1145, 5
        %v1194 = vsel %vm1083, %v1192, %v1193
        %v1195 = vrot.slane %v1143, 5
        %v1196 = vrot.slane %v1146, 5
        %v1197 = vsel %vm1083, %v1195, %v1196
        %v1201 = vsel %vm1083, %v1150, %v1164
        %v1202 = vsel %vm1083, %v1151, %v1167
        %v1203 = vsel %vm1083, %v1152, %v1170
        %vm1204 = vcmask 1045504
        %v1205 = vsel %vm1204, %v1201, %v1177
        %v1206 = vsel %vm1204, %v1202, %v1178
        %v1207 = vsel %vm1204, %v1203, %v1179
        %vm1208 = vcmask 1040384
        %v1209 = vsel %vm1208, %v1177, %v1191
        %v1210 = vsel %vm1208, %v1178, %v1194
        %v1211 = vsel %vm1208, %v1179, %v1197
        %vm1212 = vcmask 1043456
        %v1213 = vsel %vm1212, %v1209, 0.0
        %v1214 = vsel %vm1212, %v1210, 0.0
        %v1215 = vsel %vm1212, %v1211, 0.0
        %1216 = vst [vmem:[%s284] sm:$0xff] %v912
        %1217 = vst [vmem:[%s284 + $0x8] sm:$0xff] %v914
        %1218 = vst [vmem:[%s284 + $0x10] sm:$0xff] %v955
        %1219 = vst [vmem:[%s284 + $0x18] sm:$0xff] %v916
        %1220 = vst [vmem:[%s284 + $0x20] sm:$0xff] %v918
        %1221 = vst [vmem:[%s284 + $0x28] sm:$0xff] %v958
        %1222 = vst [vmem:[%s284 + $0x30] sm:$0xff] %v1205
        %1223 = vst [vmem:[%s284 + $0x38] sm:$0xff] %v1206
        %1224 = vst [vmem:[%s284 + $0x40] sm:$0xff] %v1207
        %1225 = vst [vmem:[%s284 + $0x48] sm:$0xff] %v1213
        %1226 = vst [vmem:[%s284 + $0x50] sm:$0xff] %v1214
        %1227 = vst [vmem:[%s284 + $0x58] sm:$0xff] %v1215
        %s1228 = sand.u32 %s163, 1
        %s1229 = scalar_lea.sflag [#allocation4], %s1228
        %s1230 = sand.u32 %s163, 1
        %s1231 = smul.addr %s1230, 96
        %s1232 = scalar_lea.vmem [#allocation7], %s1231
        // Predicated region
        $region53: #{tpu_custom_call.1} parent=43 // pred_check
          %p1233 = pneg %p173
        $region54: #{tpu_custom_call.1} parent=43 // pred_check_branch
          %1235 = sbr.rel (%p1233) target = $region56
        $region55: #{tpu_custom_call.1} parent=43 // pred_region
          %s1237 = ssub.s32 1536, 1536
          %1238 = vsyncadd %s1229, %s1237
          %s1239 = smul.addr %s24, 12
          %s1240 = smul.addr %s1239, 128
          %s1241 = scalar_lea.hbm %s6, %s1240
          %s1242 = sshll.u32 %s1232, 4
          %s1243 = int_to_ptr.vmem [resolvable:$true] %s1242
          %1248 = dma.vmem_to_hbm [thread:$0]  %s1243, 1536, %s1241, %s1229, 384, 384, 24
        $region56: #{tpu_custom_call.1} parent=43 // pred_fallthru
          _
      $region44: #{tpu_custom_call.1} parent=5 // pred_fallthru
        _
      %p1249 = scmp.le.s32.totalorder 2, %s19
      // Predicated region
      $region57: #{tpu_custom_call.1} parent=5 // pred_check
        %p1250 = pneg %p1249
      $region58: #{tpu_custom_call.1} parent=5 // pred_check_branch
        %1252 = sbr.rel (%p1250) target = $region60
      $region59: #{tpu_custom_call.1} parent=5 // pred_region
        %s1253 = ssub.s32 %s19, 2
        // Predicated region
        $region61: #{tpu_custom_call.1} parent=59 // pred_check
          %p1254 = pneg %p179
        $region62: #{tpu_custom_call.1} parent=59 // pred_check_branch
          %1256 = sbr.rel (%p1254) target = $region64
        $region63: #{tpu_custom_call.1} parent=59 // pred_region
          %s1257 = sand.u32 %s164, 1
          %s1258 = scalar_lea.sflag [#allocation4], %s1257
          %s1259 = sand.u32 %s164, 1
          %s1260 = smul.addr %s1259, 96
          %s1261 = scalar_lea.vmem [#allocation7], %s1260
          %1262 = dma.done %s1258, 1536
        $region64: #{tpu_custom_call.1} parent=59 // pred_fallthru
          _
      $region60: #{tpu_custom_call.1} parent=5 // pred_fallthru
        _
    $region6: #{tpu_custom_call.1} parent=1 // loop_footer
      %s23 = sadd.s32 1, %s19
    $region7: #{tpu_custom_call.1} parent=1 // loop_footer_branch
      %18 = sbr.rel target = $region3
    $region8: #{tpu_custom_call.1} parent=1 // loop_exit
      _
    %1263 = vsyncpa [#allocation3], 1
    %s1264 = scalar_lea.sflag [#allocation3], 1
    %1265 = vsyncpa %s1264, 1
    %1266 = vsyncpa [#allocation6], 1
    %1267 = vsyncpa [#allocation4], 1
    %s1268 = scalar_lea.sflag [#allocation4], 1
    %1269 = vsyncpa %s1268, 1

</llo_original>
